<compile_context>
chip_gen: v7x
topology: tpu7x:2x2x1
jax: 0.10.0
libtpu: 0.0.40
codegen_flags: <defaults>
</compile_context>

<pallas_src>
import jax
import jax.numpy as jnp
import numpy as np
from jax.experimental import pallas as pl
from jax.experimental.pallas import tpu as pltpu

# ---- Module hyper-parameters (small, consistent with the forward pass) -------
N, C_IN, T, V = 2, 4, 8, 16       # batch, in_channels, temporal length, graph nodes
C_OUT = 8                         # out_channels
KT = 3                            # temporal kernel size  (kernel_size[0], odd)
KS = 2                            # graph/spatial kernel size (kernel_size[1] == A.shape[0])
PAD = (KT - 1) // 2
BN_EPS = 1e-5

NT = N * T                        # rows handled by the single kernel invocation
DIN = V * C_IN                    # 64  (flat input feature dim)
DOUT = V * C_OUT                  # 128 (flat output feature dim == lane width)


# ------------------------------- Pallas kernel --------------------------------
def _st_gcn_kernel(x_ref, m_ref, wt_ref, wres_ref, bias_ref, out_ref):
    # x: (NT, DIN)=(16,64)   m: (DIN, DOUT)=(64,128)   wt: (KT, DOUT, DOUT)
    # wres: (DIN, DOUT)      bias: (2, DOUT)           out: (NT, DOUT)=(16,128)
    x = x_ref[...]
    bias = bias_ref[...]

    # --- GCN: fused (1x1 conv ∘ graph einsum ∘ BN1) then ReLU -----------------
    h = jnp.maximum(
        jnp.dot(x, m_ref[...], preferred_element_type=jnp.float32) + bias[0:1, :],
        0.0)                                            # (NT, DOUT)

    # --- residual 1x1 conv (+ folded BN) initializes the accumulator; the
    #     combined bias row also carries the folded tcn bias + BN2 shift -------
    acc = jnp.dot(x, wres_ref[...], preferred_element_type=jnp.float32) + bias[1:2, :]

    # --- temporal conv (KT,1): shifted windows built with XLU rolls along the
    #     row (= batch*time) axis + per-batch boundary masks (zero padding that
    #     never leaks across the batch boundary) -------------------------------
    t_idx = jax.lax.broadcasted_iota(jnp.int32, (N, T, DOUT), 1).reshape(NT, DOUT)
    for dt in range(KT):                                # static, KT == 3
        d = dt - PAD
        if d == 0:
            win = h
        else:
            rolled = pltpu.roll(h, shift=(-d) % NT, axis=0)
            valid = jnp.logical_and(t_idx + d >= 0, t_idx + d < T)
            win = jnp.where(valid, rolled, 0.0)
        acc = acc + jnp.dot(win, wt_ref[dt], preferred_element_type=jnp.float32)

    out_ref[...] = jnp.maximum(acc, 0.0).astype(out_ref.dtype)


# ----------------------- Wrapper-side parameter fusion ------------------------
def _fuse_params(A, p):
    eyeV = jnp.eye(V, dtype=jnp.float32)

    def tile_c(v):                      # per-channel (C_OUT,) -> (DOUT,) lane vector
        return jnp.tile(v.reshape(C_OUT), V)

    bn1_s, bn1_b = tile_c(p['bn1_s']), tile_c(p['bn1_b'])
    bn2_s, bn2_b = tile_c(p['bn2_s']), tile_c(p['bn2_b'])
    bnr_s, bnr_b = tile_c(p['bnr_s']), tile_c(p['bnr_b'])
    b_tcn, b_res = tile_c(p['b_tcn']), tile_c(p['b_res'])

    # GCN: fold the 1x1 conv weight with the graph adjacency A (and BN1 scale).
    # M[v*Cin+ci, w*Cout+c] = sum_k w_gcn[ci, k*Cout+c] * A[k, v, w]
    Wg = p['w_gcn'].reshape(C_IN, KS, C_OUT)
    M = jnp.einsum('ikc,kvw->viwc', Wg, A).reshape(DIN, DOUT)
    M_f = M * bn1_s[None, :]
    bg = p['b_gcn'].reshape(KS, C_OUT)
    b_gcn_eff = jnp.einsum('kc,kw->wc', bg, A.sum(axis=1)).reshape(DOUT)
    bias_h = b_gcn_eff * bn1_s + bn1_b

    # Temporal conv: per-node block-diagonal (DOUT, DOUT) weights, BN2 scale folded.
    Wt_f = jnp.stack(
        [jnp.kron(eyeV, p['w_tcn'][dt]) * bn2_s[None, :] for dt in range(KT)])

    # Residual 1x1 conv: block-diagonal (DIN, DOUT), BN_res scale folded.
    Wres_f = jnp.kron(eyeV, p['w_res']) * bnr_s[None, :]

    # Output bias = folded (tcn conv bias + BN2 shift) + (residual bias + BN shift).
    bias_out = (b_tcn * bn2_s + bn2_b) + (b_res * bnr_s + bnr_b)

    biases = jnp.stack([bias_h, bias_out])              # (2, DOUT), one DMA
    return M_f, Wt_f, Wres_f, biases


# --------------------------------- Wrapper ------------------------------------
def st_gcn_forward(x_nchw, A, p):
    """x_nchw: (N, C_in, T, V) f32, A: (K, V, V) f32 -> ((N, C_out, T, V), A)."""
    M_f, Wt_f, Wres_f, biases = _fuse_params(A, p)

    # NCHW -> channels-last flat rows: x2d[n*T+t, v*Cin+ci] = x[n, ci, t, v]
    x2d = jnp.transpose(x_nchw, (0, 2, 3, 1)).reshape(NT, DIN)

    def full(shape):                                    # full-array block, no grid dep
        nd = len(shape)
        return pl.BlockSpec(shape, lambda i, _nd=nd: (0,) * _nd)

    flops = 2 * NT * (2 * DIN * DOUT + KT * DOUT * DOUT)
    bytes_accessed = 4 * (NT * DIN + DIN * DOUT * 2 + KT * DOUT * DOUT
                          + 2 * DOUT + NT * DOUT)

    out2d = pl.pallas_call(
        _st_gcn_kernel,
        out_shape=jax.ShapeDtypeStruct((NT, DOUT), jnp.float32),
        grid_spec=pltpu.PrefetchScalarGridSpec(
            num_scalar_prefetch=0,
            grid=(1,),
            in_specs=[
                full((NT, DIN)),          # x (16, 64)
                full((DIN, DOUT)),        # fused GCN weight (64, 128)
                full((KT, DOUT, DOUT)),   # block-diag temporal weights (3, 128, 128)
                full((DIN, DOUT)),        # block-diag residual weight (64, 128)
                full((2, DOUT)),          # packed bias slab (2, 128)
            ],
            out_specs=full((NT, DOUT)),
        ),
        compiler_params=pltpu.CompilerParams(dimension_semantics=("arbitrary",)),
        cost_estimate=pl.CostEstimate(flops=flops, transcendentals=0,
                                      bytes_accessed=bytes_accessed),
    )(x2d, M_f, Wt_f, Wres_f, biases)

    out = out2d.reshape(N, T, V, C_OUT)                 # rows -> (N, T, V(=w), C_out)
    return jnp.transpose(out, (0, 3, 1, 2)), A          # back to (N, C_out, T, V)


# ----------------------------- Pure-JAX reference -----------------------------
def ref_forward(x_nchw, A, p):
    x = jnp.transpose(x_nchw, (0, 2, 3, 1))
    y = jnp.einsum('ntvc,cd->ntvd', x, p['w_gcn']) + p['b_gcn']
    y = y.reshape(N, T, V, KS, C_OUT)
    z = jnp.einsum('ntvkc,kvw->ntwc', y, A)
    h = jnp.maximum(z * p['bn1_s'] + p['bn1_b'], 0.0)
    hp = jnp.pad(h, ((0, 0), (PAD, PAD), (0, 0), (0, 0)))
    o = jnp.zeros((N, T, V, C_OUT), jnp.float32) + p['b_tcn']
    for dt in range(KT):
        o = o + jnp.einsum('ntvc,cd->ntvd', hp[:, dt:dt + T], p['w_tcn'][dt])
    o = o * p['bn2_s'] + p['bn2_b']
    r = jnp.einsum('ntvc,cd->ntvd', x, p['w_res']) + p['b_res']
    r = r * p['bnr_s'] + p['bnr_b']
    return jnp.transpose(jnp.maximum(o + r, 0.0), (0, 3, 1, 2))


# ----------------------- Deterministic parameter setup ------------------------
def _bn_fold(key, c):
    k1, k2, k3, k4 = jax.random.split(key, 4)
    gamma = 1.0 + 0.1 * jax.random.normal(k1, (c,), jnp.float32)
    beta = 0.05 * jax.random.normal(k2, (c,), jnp.float32)
    mean = 0.1 * jax.random.normal(k3, (c,), jnp.float32)
    var = jax.random.uniform(k4, (c,), jnp.float32, minval=0.5, maxval=1.5)
    scale = gamma / jnp.sqrt(var + BN_EPS)
    shift = beta - mean * scale
    return scale.reshape(1, c), shift.reshape(1, c)


if __name__ == "__main__":
    key = jax.random.PRNGKey(0)
    ks = jax.random.split(key, 12)

    x = jax.random.normal(ks[0], (N, C_IN, T, V), jnp.float32)
    A = jax.random.uniform(ks[1], (KS, V, V), jnp.float32) / V

    params = {
        # gcn 1x1 conv: weight laid out (C_in, K*C_out) == torch (K*C_out, C_in, 1, 1)^T
        'w_gcn': 0.3 * jax.random.normal(ks[2], (C_IN, KS * C_OUT), jnp.float32),
        'b_gcn': 0.1 * jax.random.normal(ks[3], (1, KS * C_OUT), jnp.float32),
        # temporal conv (KT,1): laid out (KT, C_in, C_out) == torch (C_out, C_in, KT, 1) permuted
        'w_tcn': 0.2 * jax.random.normal(ks[4], (KT, C_OUT, C_OUT), jnp.float32),
        'b_tcn': 0.1 * jax.random.normal(ks[5], (1, C_OUT), jnp.float32),
        # residual 1x1 conv
        'w_res': 0.3 * jax.random.normal(ks[6], (C_IN, C_OUT), jnp.float32),
        'b_res': 0.1 * jax.random.normal(ks[7], (1, C_OUT), jnp.float32),
    }
    params['bn1_s'], params['bn1_b'] = _bn_fold(ks[8], C_OUT)
    params['bn2_s'], params['bn2_b'] = _bn_fold(ks[9], C_OUT)
    params['bnr_s'], params['bnr_b'] = _bn_fold(ks[10], C_OUT)

    out, A_out = st_gcn_forward(x, A, params)
    out = jax.block_until_ready(out)

    ref = ref_forward(x, A, params)
    np.testing.assert_allclose(np.asarray(out), np.asarray(ref), rtol=1e-4, atol=1e-4)
    assert out.shape == (N, C_OUT, T, V)
    assert A_out.shape == (KS, V, V)
    print("KERNEL_OK")
</pallas_src>

<mosaic_0001>
module attributes {stable_mosaic.version = 11 : i64} {
  func.func @_st_gcn_kernel(%arg0: i32, %arg1: memref<16x64xf32, #tpu.memory_space<vmem>>, %arg2: memref<64x128xf32, #tpu.memory_space<vmem>>, %arg3: memref<3x128x128xf32, #tpu.memory_space<vmem>>, %arg4: memref<64x128xf32, #tpu.memory_space<vmem>>, %arg5: memref<2x128xf32, #tpu.memory_space<vmem>>, %arg6: memref<16x128xf32, #tpu.memory_space<vmem>>) attributes {dimension_semantics = [#tpu.dimension_semantics<arbitrary>], iteration_bounds = array<i64: 1>, scalar_prefetch = 0 : i64, scratch_operands = 0 : i64, tpu.core_type = #tpu.core_type<tc>, window_params = [{pipeline_mode = #tpu.pipeline_mode<synchronous>, transform_indices = @transform_0, window_bounds = array<i64: 16, 64>}, {pipeline_mode = #tpu.pipeline_mode<synchronous>, transform_indices = @transform_1, window_bounds = array<i64: 64, 128>}, {pipeline_mode = #tpu.pipeline_mode<synchronous>, transform_indices = @transform_2, window_bounds = array<i64: 3, 128, 128>}, {pipeline_mode = #tpu.pipeline_mode<synchronous>, transform_indices = @transform_3, window_bounds = array<i64: 64, 128>}, {pipeline_mode = #tpu.pipeline_mode<synchronous>, transform_indices = @transform_4, window_bounds = array<i64: 2, 128>}, {pipeline_mode = #tpu.pipeline_mode<synchronous>, transform_indices = @transform_5, window_bounds = array<i64: 16, 128>}]} {
    %c0 = arith.constant 0 : index
    %c0_0 = arith.constant 0 : index
    %0 = vector.load %arg1[%c0, %c0_0] : memref<16x64xf32, #tpu.memory_space<vmem>>, vector<16x64xf32>
    %c0_1 = arith.constant 0 : index
    %c0_2 = arith.constant 0 : index
    %1 = vector.load %arg5[%c0_1, %c0_2] : memref<2x128xf32, #tpu.memory_space<vmem>>, vector<2x128xf32>
    %c0_3 = arith.constant 0 : index
    %c0_4 = arith.constant 0 : index
    %2 = vector.load %arg2[%c0_3, %c0_4] : memref<64x128xf32, #tpu.memory_space<vmem>>, vector<64x128xf32>
    %cst = arith.constant dense<0.000000e+00> : vector<16x128xf32>
    %3 = tpu.matmul %0, %2, %cst {dimension_numbers = #tpu.dot_dimension_numbers<[1], [0], [0], [1], [0, 0, 1, 1], [], []>} : vector<16x64xf32>, vector<64x128xf32>, vector<16x128xf32> -> vector<16x128xf32>
    %4 = vector.extract_strided_slice %1 {offsets = [0, 0], sizes = [1, 128], strides = [1, 1]} : vector<2x128xf32> to vector<1x128xf32>
    %5 = vector.broadcast %4 : vector<1x128xf32> to vector<16x128xf32>
    %6 = arith.addf %3, %5 : vector<16x128xf32>
    %cst_5 = arith.constant 0.000000e+00 : f32
    %7 = vector.broadcast %cst_5 : f32 to vector<16x128xf32>
    %8 = arith.maximumf %6, %7 : vector<16x128xf32>
    %c0_6 = arith.constant 0 : index
    %c0_7 = arith.constant 0 : index
    %9 = vector.load %arg4[%c0_6, %c0_7] : memref<64x128xf32, #tpu.memory_space<vmem>>, vector<64x128xf32>
    %cst_8 = arith.constant dense<0.000000e+00> : vector<16x128xf32>
    %10 = tpu.matmul %0, %9, %cst_8 {dimension_numbers = #tpu.dot_dimension_numbers<[1], [0], [0], [1], [0, 0, 1, 1], [], []>} : vector<16x64xf32>, vector<64x128xf32>, vector<16x128xf32> -> vector<16x128xf32>
    %11 = vector.extract_strided_slice %1 {offsets = [1, 0], sizes = [1, 128], strides = [1, 1]} : vector<2x128xf32> to vector<1x128xf32>
    %12 = vector.broadcast %11 : vector<1x128xf32> to vector<16x128xf32>
    %13 = arith.addf %10, %12 : vector<16x128xf32>
    %14 = tpu.iota {dimensions = array<i32: 1>} : vector<2x8x128xi32>
    %15 = vector.shape_cast %14 : vector<2x8x128xi32> to vector<16x128xi32>
    %c1_i32 = arith.constant 1 : i32
    %16 = tpu.dynamic_rotate %8 by %c1_i32 dim 0 : vector<16x128xf32>, i32 -> vector<16x128xf32>
    %c-1_i32 = arith.constant -1 : i32
    %17 = vector.broadcast %c-1_i32 : i32 to vector<16x128xi32>
    %18 = arith.addi %15, %17 : vector<16x128xi32>
    %c0_i32 = arith.constant 0 : i32
    %19 = vector.broadcast %c0_i32 : i32 to vector<16x128xi32>
    %20 = arith.cmpi sge, %18, %19 : vector<16x128xi32>
    %c-1_i32_9 = arith.constant -1 : i32
    %21 = vector.broadcast %c-1_i32_9 : i32 to vector<16x128xi32>
    %22 = arith.addi %15, %21 : vector<16x128xi32>
    %c8_i32 = arith.constant 8 : i32
    %23 = vector.broadcast %c8_i32 : i32 to vector<16x128xi32>
    %24 = arith.cmpi slt, %22, %23 : vector<16x128xi32>
    %25 = arith.andi %20, %24 : vector<16x128xi1>
    %cst_10 = arith.constant 0.000000e+00 : f32
    %26 = vector.broadcast %cst_10 : f32 to vector<16x128xf32>
    %27 = arith.select %25, %16, %26 : vector<16x128xi1>, vector<16x128xf32>
    %c0_11 = arith.constant 0 : index
    %c0_12 = arith.constant 0 : index
    %c0_13 = arith.constant 0 : index
    %28 = vector.load %arg3[%c0_11, %c0_12, %c0_13] : memref<3x128x128xf32, #tpu.memory_space<vmem>>, vector<1x128x128xf32>
    %29 = vector.shape_cast %28 : vector<1x128x128xf32> to vector<128x128xf32>
    %cst_14 = arith.constant dense<0.000000e+00> : vector<16x128xf32>
    %30 = tpu.matmul %27, %29, %cst_14 {dimension_numbers = #tpu.dot_dimension_numbers<[1], [0], [0], [1], [0, 0, 1, 1], [], []>} : vector<16x128xf32>, vector<128x128xf32>, vector<16x128xf32> -> vector<16x128xf32>
    %31 = arith.addf %13, %30 : vector<16x128xf32>
    %c1 = arith.constant 1 : index
    %c0_15 = arith.constant 0 : index
    %c0_16 = arith.constant 0 : index
    %32 = vector.load %arg3[%c1, %c0_15, %c0_16] : memref<3x128x128xf32, #tpu.memory_space<vmem>>, vector<1x128x128xf32>
    %33 = vector.shape_cast %32 : vector<1x128x128xf32> to vector<128x128xf32>
    %cst_17 = arith.constant dense<0.000000e+00> : vector<16x128xf32>
    %34 = tpu.matmul %8, %33, %cst_17 {dimension_numbers = #tpu.dot_dimension_numbers<[1], [0], [0], [1], [0, 0, 1, 1], [], []>} : vector<16x128xf32>, vector<128x128xf32>, vector<16x128xf32> -> vector<16x128xf32>
    %35 = arith.addf %31, %34 : vector<16x128xf32>
    %c15_i32 = arith.constant 15 : i32
    %36 = tpu.dynamic_rotate %8 by %c15_i32 dim 0 : vector<16x128xf32>, i32 -> vector<16x128xf32>
    %c1_i32_18 = arith.constant 1 : i32
    %37 = vector.broadcast %c1_i32_18 : i32 to vector<16x128xi32>
    %38 = arith.addi %15, %37 : vector<16x128xi32>
    %c0_i32_19 = arith.constant 0 : i32
    %39 = vector.broadcast %c0_i32_19 : i32 to vector<16x128xi32>
    %40 = arith.cmpi sge, %38, %39 : vector<16x128xi32>
    %c1_i32_20 = arith.constant 1 : i32
    %41 = vector.broadcast %c1_i32_20 : i32 to vector<16x128xi32>
    %42 = arith.addi %15, %41 : vector<16x128xi32>
    %c8_i32_21 = arith.constant 8 : i32
    %43 = vector.broadcast %c8_i32_21 : i32 to vector<16x128xi32>
    %44 = arith.cmpi slt, %42, %43 : vector<16x128xi32>
    %45 = arith.andi %40, %44 : vector<16x128xi1>
    %cst_22 = arith.constant 0.000000e+00 : f32
    %46 = vector.broadcast %cst_22 : f32 to vector<16x128xf32>
    %47 = arith.select %45, %36, %46 : vector<16x128xi1>, vector<16x128xf32>
    %c2 = arith.constant 2 : index
    %c0_23 = arith.constant 0 : index
    %c0_24 = arith.constant 0 : index
    %48 = vector.load %arg3[%c2, %c0_23, %c0_24] : memref<3x128x128xf32, #tpu.memory_space<vmem>>, vector<1x128x128xf32>
    %49 = vector.shape_cast %48 : vector<1x128x128xf32> to vector<128x128xf32>
    %cst_25 = arith.constant dense<0.000000e+00> : vector<16x128xf32>
    %50 = tpu.matmul %47, %49, %cst_25 {dimension_numbers = #tpu.dot_dimension_numbers<[1], [0], [0], [1], [0, 0, 1, 1], [], []>} : vector<16x128xf32>, vector<128x128xf32>, vector<16x128xf32> -> vector<16x128xf32>
    %51 = arith.addf %35, %50 : vector<16x128xf32>
    %cst_26 = arith.constant 0.000000e+00 : f32
    %52 = vector.broadcast %cst_26 : f32 to vector<16x128xf32>
    %53 = arith.maximumf %51, %52 : vector<16x128xf32>
    %c0_27 = arith.constant 0 : index
    %c0_28 = arith.constant 0 : index
    %54 = vector.load %arg6[%c0_27, %c0_28] : memref<16x128xf32, #tpu.memory_space<vmem>>, vector<16x128xf32>
    tpu.vector_store %arg6[%c0_27, %c0_28], %53 {strides = array<i32>} : memref<16x128xf32, #tpu.memory_space<vmem>>, vector<16x128xf32>,
    return
  }
  func.func @transform_0(%arg0: i32) -> (i32, i32) {
    %c0_i32 = arith.constant 0 : i32
    %c0_i32_0 = arith.constant 0 : i32
    %c0_i32_1 = arith.constant 0 : i32
    return %c0_i32, %c0_i32_0 : i32, i32
  }
  func.func @transform_1(%arg0: i32) -> (i32, i32) {
    %c0_i32 = arith.constant 0 : i32
    %c0_i32_0 = arith.constant 0 : i32
    %c0_i32_1 = arith.constant 0 : i32
    return %c0_i32, %c0_i32_0 : i32, i32
  }
  func.func @transform_2(%arg0: i32) -> (i32, i32, i32) {
    %c0_i32 = arith.constant 0 : i32
    %c0_i32_0 = arith.constant 0 : i32
    %c0_i32_1 = arith.constant 0 : i32
    %c0_i32_2 = arith.constant 0 : i32
    return %c0_i32, %c0_i32_0, %c0_i32_1 : i32, i32, i32
  }
  func.func @transform_3(%arg0: i32) -> (i32, i32) {
    %c0_i32 = arith.constant 0 : i32
    %c0_i32_0 = arith.constant 0 : i32
    %c0_i32_1 = arith.constant 0 : i32
    return %c0_i32, %c0_i32_0 : i32, i32
  }
  func.func @transform_4(%arg0: i32) -> (i32, i32) {
    %c0_i32 = arith.constant 0 : i32
    %c0_i32_0 = arith.constant 0 : i32
    %c0_i32_1 = arith.constant 0 : i32
    return %c0_i32, %c0_i32_0 : i32, i32
  }
  func.func @transform_5(%arg0: i32) -> (i32, i32) {
    %c0_i32 = arith.constant 0 : i32
    %c0_i32_0 = arith.constant 0 : i32
    %c0_i32_1 = arith.constant 0 : i32
    return %c0_i32, %c0_i32_0 : i32, i32
  }
}

</mosaic_0001>

<llo_original>
// kernel: tpu_custom_call.1
$region0: #{tpu_custom_call.1}
  #allocation0 [shape = 'u32[]', space=smem, size = 0x4, offset = 0x4, fixed_abs, tag = 'smem constant byte address 0x4 - core index']
  #allocation1 [shape = 'u32[144,128]{1,0:T(1,128)}', space=vmem, size = 0x12000, scoped, tag = 'internal scratch']
  %s0 = inlined_call_operand.hbm [shape: f32[16,64], index: 0, kind: input, shape index: {}]
  %s1 = inlined_call_operand.hbm [shape: f32[64,128], index: 1, kind: input, shape index: {}]
  %s2 = inlined_call_operand.hbm [shape: f32[3,128,128], index: 2, kind: input, shape index: {}]
  %s3 = inlined_call_operand.hbm [shape: f32[64,128], index: 3, kind: input, shape index: {}]
  %s4 = inlined_call_operand.vmem [shape: f32[2,128], index: 4, kind: input, shape index: {}]
  %s5 = inlined_call_operand.hbm [shape: f32[16,128], index: 5, kind: output, shape index: {}]
  %s6 = sld [smem:[#allocation0]]
  $region46: #{tpu_custom_call.1} parent=0
    _
  %s8 = ssub.s32 1, %s6
  %s9 = scalar_select 0, %s8, %s6
  $region1: #{tpu_custom_call.1} parent=0
    #allocation2 [shape = 'u8[8192]{0}', space=vmem, size = 0x2000, scoped, tag = 'input window, operand 0, single buffered']
    #allocation3 [shape = 's32[1]{0}', space=sflag, size = 0x4, scoped, tag = 'scoped memory for tpu_custom_call.1']
    #allocation4 [shape = 's32[1]{0}', space=sflag, size = 0x4, scoped, tag = 'scoped memory for tpu_custom_call.1']
    #allocation5 [shape = 'u8[32768]{0}', space=vmem, size = 0x8000, scoped, tag = 'input window, operand 1, single buffered']
    #allocation6 [shape = 's32[1]{0}', space=sflag, size = 0x4, scoped, tag = 'scoped memory for tpu_custom_call.1']
    #allocation7 [shape = 'u8[196608]{0}', space=vmem, size = 0x30000, scoped, tag = 'input window, operand 2, single buffered']
    #allocation8 [shape = 'u8[32768]{0}', space=vmem, size = 0x8000, scoped, tag = 'input window, operand 3, single buffered']
    #allocation9 [shape = 's32[1]{0}', space=sflag, size = 0x4, scoped, tag = 'scoped memory for tpu_custom_call.1']
    #allocation10 [shape = 'u8[8192]{0}', space=vmem, size = 0x2000, scoped, tag = 'output window, operand 0, single buffered']
    %10 = vsyncpa [#allocation3], 0
    %11 = vsyncpa [#allocation6], 0
    %12 = vsyncpa [#allocation9], 0
    %13 = vsyncpa [#allocation4], 0
    // Predicated region
    $region2: #{tpu_custom_call.1} parent=1 // pred_check
      _
    $region3: #{tpu_custom_call.1} parent=1 // pred_check_branch
      %15 = sbr.rel (0) target = $region5
    $region4: #{tpu_custom_call.1} parent=1 // pred_region
      %s17 = ssub.s32 256, 256
      %18 = vsyncadd [#allocation3], %s17
      %s19 = sshll.u32 [#allocation2], 4
      %s20 = int_to_ptr.vmem [resolvable:$true] %s19
      %25 = dma.hbm_to_vmem [thread:$0]  %s0, 256, %s20, [#allocation3], 128, 128, 8
    $region5: #{tpu_custom_call.1} parent=1 // pred_fallthru
      _
    // Predicated region
    $region6: #{tpu_custom_call.1} parent=1 // pred_check
      _
    $region7: #{tpu_custom_call.1} parent=1 // pred_check_branch
      %27 = sbr.rel (0) target = $region9
    $region8: #{tpu_custom_call.1} parent=1 // pred_region
      %s29 = ssub.s32 1024, 1024
      %30 = vsyncadd [#allocation6], %s29
      %s31 = sshll.u32 [#allocation5], 4
      %s32 = int_to_ptr.vmem [resolvable:$true] %s31
      %37 = dma.hbm_to_vmem [thread:$0]  %s1, 1024, %s32, [#allocation6], 128, 128, 8
    $region9: #{tpu_custom_call.1} parent=1 // pred_fallthru
      _
    // Predicated region
    $region10: #{tpu_custom_call.1} parent=1 // pred_check
      _
    $region11: #{tpu_custom_call.1} parent=1 // pred_check_branch
      %39 = sbr.rel (0) target = $region13
    $region12: #{tpu_custom_call.1} parent=1 // pred_region
      %s41 = ssub.s32 6144, 6144
      %42 = vsyncadd [#allocation6], %s41
      %s43 = sshll.u32 [#allocation7], 4
      %s44 = int_to_ptr.vmem [resolvable:$true] %s43
      %49 = dma.hbm_to_vmem [thread:$0]  %s2, 6144, %s44, [#allocation6], 128, 128, 8
    $region13: #{tpu_custom_call.1} parent=1 // pred_fallthru
      _
    // Predicated region
    $region14: #{tpu_custom_call.1} parent=1 // pred_check
      _
    $region15: #{tpu_custom_call.1} parent=1 // pred_check_branch
      %51 = sbr.rel (0) target = $region17
    $region16: #{tpu_custom_call.1} parent=1 // pred_region
      %s53 = ssub.s32 1024, 1024
      %54 = vsyncadd [#allocation9], %s53
      %s55 = sshll.u32 [#allocation8], 4
      %s56 = int_to_ptr.vmem [resolvable:$true] %s55
      %61 = dma.hbm_to_vmem [thread:$0]  %s3, 1024, %s56, [#allocation9], 128, 128, 8
    $region17: #{tpu_custom_call.1} parent=1 // pred_fallthru
      _
    // Predicated region
    $region18: #{tpu_custom_call.1} parent=1 // pred_check
      _
    $region19: #{tpu_custom_call.1} parent=1 // pred_check_branch
      %63 = sbr.rel (0) target = $region21
    $region20: #{tpu_custom_call.1} parent=1 // pred_region
      _
    $region21: #{tpu_custom_call.1} parent=1 // pred_fallthru
      _
    // Predicated region
    $region22: #{tpu_custom_call.1} parent=1 // pred_check
      _
    $region23: #{tpu_custom_call.1} parent=1 // pred_check_branch
      %65 = sbr.rel (0) target = $region25
    $region24: #{tpu_custom_call.1} parent=1 // pred_region
      %66 = dma.done [#allocation3], 256
    $region25: #{tpu_custom_call.1} parent=1 // pred_fallthru
      _
    // Predicated region
    $region26: #{tpu_custom_call.1} parent=1 // pred_check
      _
    $region27: #{tpu_custom_call.1} parent=1 // pred_check_branch
      %68 = sbr.rel (0) target = $region29
    $region28: #{tpu_custom_call.1} parent=1 // pred_region
      %69 = dma.done [#allocation6], 1024
    $region29: #{tpu_custom_call.1} parent=1 // pred_fallthru
      _
    // Predicated region
    $region30: #{tpu_custom_call.1} parent=1 // pred_check
      _
    $region31: #{tpu_custom_call.1} parent=1 // pred_check_branch
      %71 = sbr.rel (0) target = $region33
    $region32: #{tpu_custom_call.1} parent=1 // pred_region
      %72 = dma.done [#allocation6], 6144
    $region33: #{tpu_custom_call.1} parent=1 // pred_fallthru
      _
    // Predicated region
    $region34: #{tpu_custom_call.1} parent=1 // pred_check
      _
    $region35: #{tpu_custom_call.1} parent=1 // pred_check_branch
      %74 = sbr.rel (0) target = $region37
    $region36: #{tpu_custom_call.1} parent=1 // pred_region
      %75 = dma.done [#allocation9], 1024
    $region37: #{tpu_custom_call.1} parent=1 // pred_fallthru
      _
    %v76 = vld [vmem:[#allocation2] sm:$0xff]
    %v77 = vld [vmem:[#allocation2 + $0x8] sm:$0xff]
    %v78 = vld [vmem:[%s4] sm:$0x3]
    %v79 = vld [vmem:[#allocation5] sm:$0xff]
    %v80 = vld [vmem:[#allocation5 + $0x8] sm:$0xff]
    %v81 = vld [vmem:[#allocation5 + $0x10] sm:$0xff]
    %v82 = vld [vmem:[#allocation5 + $0x18] sm:$0xff]
    %v83 = vld [vmem:[#allocation5 + $0x20] sm:$0xff]
    %v84 = vld [vmem:[#allocation5 + $0x28] sm:$0xff]
    %v85 = vld [vmem:[#allocation5 + $0x30] sm:$0xff]
    %v86 = vld [vmem:[#allocation5 + $0x38] sm:$0xff]
    %v87 = vlaneseq
    %v88 = vshrl.u32 %v87, 7
    %v89 = vsub.s32 0, %v88
    %v90 = vrot.slane %v78, %v89
    %vm91 = vcmask 523264
    %v93 = vsel %vm91, %v76, 0
    %v96 = vsel %vm91, %v77, 0
    %98 = vmatprep.subr.mxu0 0.0
    %99 = vmatpush1.msra.mxu0 %v79
    %100 = vmatprep.subr.mxu0 0.0
    %101 = vmatpush1.msra.mxu0 %v80
    %102 = vmatprep.subr.mxu0 0.0
    %103 = vmatpush1.msra.mxu0 %v81
    %104 = vmatprep.subr.mxu0 0.0
    %105 = vmatpush1.msra.mxu0 %v82
    %106 = vmatprep.subr.mxu0 0.0
    %107 = vmatpush1.msra.mxu0 %v83
    %108 = vmatprep.subr.mxu0 0.0
    %109 = vmatpush1.msra.mxu0 %v84
    %110 = vmatprep.subr.mxu0 0.0
    %111 = vmatpush1.msra.mxu0 %v85
    %112 = vmatprep.subr.mxu0 0.0
    %113 = vmatpush1.msra.mxu0 %v86
    %114 = vmatprep.subr.mxu0 0.0
    %115 = vmatpush1.msra.mxu0 0.0
    %116 = vmatprep.subr.mxu0 0.0
    %117 = vmatpush1.msra.mxu0 0.0
    %118 = vmatprep.subr.mxu0 0.0
    %119 = vmatpush1.msra.mxu0 0.0
    %120 = vmatprep.subr.mxu0 0.0
    %121 = vmatpush1.msra.mxu0 0.0
    %122 = vmatprep.subr.mxu0 0.0
    %123 = vmatpush1.msra.mxu0 0.0
    %124 = vmatprep.subr.mxu0 0.0
    %125 = vmatpush1.msra.mxu0 0.0
    %126 = vmatprep.subr.mxu0 0.0
    %127 = vmatpush1.msra.mxu0 0.0
    %128 = vmatprep.subr.mxu0 0.0
    %129 = vmatpush1.msra.mxu0 0.0
    %130 = vmatprep.subr.mxu0 0.0
    %131 = vmatpush1.msra.mxu0 0.0
    %132 = vmatprep.subr.mxu0 0.0
    %133 = vmatpush1.msra.mxu0 0.0
    %134 = vmatprep.subr.mxu0 0.0
    %135 = vmatpush1.msra.mxu0 0.0
    %136 = vmatprep.subr.mxu0 0.0
    %137 = vmatpush1.msra.mxu0 0.0
    %138 = vmatprep.subr.mxu0 0.0
    %139 = vmatpush1.msra.mxu0 0.0
    %140 = vmatprep.subr.mxu0 0.0
    %141 = vmatpush1.msra.mxu0 0.0
    %142 = vmatprep.subr.mxu0 0.0
    %143 = vmatpush1.msra.mxu0 0.0
    %144 = vmatprep.subr.mxu0 0.0
    %145 = vmatpush1.msra.mxu0 0.0
    %146 = vmatprep.subr.mxu0 0.0
    %147 = vmatpush1.msra.mxu0 0.0
    %148 = vmatprep.subr.mxu0 0.0
    %149 = vmatpush1.msra.mxu0 0.0
    %150 = vmatprep.subr.mxu0 0.0
    %151 = vmatpush1.msra.mxu0 0.0
    %152 = vmatprep.subr.mxu0 0.0
    %153 = vmatpush1.msra.mxu0 0.0
    %154 = vmatprep.subr.mxu0 0.0
    %155 = vmatpush1.msra.mxu0 0.0
    %156 = vmatprep.subr.mxu0 0.0
    %157 = vmatpush1.msra.mxu0 0.0
    %158 = vmatprep.subr.mxu0 0.0
    %159 = vmatpush1.msra.mxu0 0.0
    %160 = vmatprep.subr.mxu0 0.0
    %161 = vmatpush1.msra.mxu0 0.0
    %162 = vmatprep.mubr.f32.mxu0 0.0
    %163 = vmatmul.mubr.f32.gmra.mrb[0].mxu0 %v93
    %v164 = vpop.f32.mrb[0].mxu0
    %v165 = vadd.f32 %v90, %v164
    %v166 = vpop.f32.mrb[0].mxu0
    %167 = vmatprep.mubr.f32.mxu0 0.0
    %168 = vmatmul.mubr.f32.gmra.mrb[0].mxu0 %v96
    %v169 = vpop.f32.mrb[0].mxu0
    %v170 = vadd.f32 %v90, %v169
    %v171 = vpop.f32.mrb[0].mxu0
    %172 = vdwg.mxu0
    %v173 = vmax.f32 %v165, 0.0
    %v174 = vmax.f32 %v170, 0.0
    %v175 = vld [vmem:[#allocation8] sm:$0xff]
    %v176 = vld [vmem:[#allocation8 + $0x8] sm:$0xff]
    %v177 = vld [vmem:[#allocation8 + $0x10] sm:$0xff]
    %v178 = vld [vmem:[#allocation8 + $0x18] sm:$0xff]
    %v179 = vld [vmem:[#allocation8 + $0x20] sm:$0xff]
    %v180 = vld [vmem:[#allocation8 + $0x28] sm:$0xff]
    %v181 = vld [vmem:[#allocation8 + $0x30] sm:$0xff]
    %v182 = vld [vmem:[#allocation8 + $0x38] sm:$0xff]
    %v183 = vlaneseq
    %v184 = vshrl.u32 %v183, 7
    %v185 = vsub.s32 1, %v184
    %v186 = vrot.slane %v78, %v185
    %187 = vmatprep.subr.mxu0 0.0
    %188 = vmatpush1.msra.mxu0 %v175
    %189 = vmatprep.subr.mxu0 0.0
    %190 = vmatpush1.msra.mxu0 %v176
    %191 = vmatprep.subr.mxu0 0.0
    %192 = vmatpush1.msra.mxu0 %v177
    %193 = vmatprep.subr.mxu0 0.0
    %194 = vmatpush1.msra.mxu0 %v178
    %195 = vmatprep.subr.mxu0 0.0
    %196 = vmatpush1.msra.mxu0 %v179
    %197 = vmatprep.subr.mxu0 0.0
    %198 = vmatpush1.msra.mxu0 %v180
    %199 = vmatprep.subr.mxu0 0.0
    %200 = vmatpush1.msra.mxu0 %v181
    %201 = vmatprep.subr.mxu0 0.0
    %202 = vmatpush1.msra.mxu0 %v182
    %203 = vmatprep.subr.mxu0 0.0
    %204 = vmatpush1.msra.mxu0 0.0
    %205 = vmatprep.subr.mxu0 0.0
    %206 = vmatpush1.msra.mxu0 0.0
    %207 = vmatprep.subr.mxu0 0.0
    %208 = vmatpush1.msra.mxu0 0.0
    %209 = vmatprep.subr.mxu0 0.0
    %210 = vmatpush1.msra.mxu0 0.0
    %211 = vmatprep.subr.mxu0 0.0
    %212 = vmatpush1.msra.mxu0 0.0
    %213 = vmatprep.subr.mxu0 0.0
    %214 = vmatpush1.msra.mxu0 0.0
    %215 = vmatprep.subr.mxu0 0.0
    %216 = vmatpush1.msra.mxu0 0.0
    %217 = vmatprep.subr.mxu0 0.0
    %218 = vmatpush1.msra.mxu0 0.0
    %219 = vmatprep.subr.mxu0 0.0
    %220 = vmatpush1.msra.mxu0 0.0
    %221 = vmatprep.subr.mxu0 0.0
    %222 = vmatpush1.msra.mxu0 0.0
    %223 = vmatprep.subr.mxu0 0.0
    %224 = vmatpush1.msra.mxu0 0.0
    %225 = vmatprep.subr.mxu0 0.0
    %226 = vmatpush1.msra.mxu0 0.0
    %227 = vmatprep.subr.mxu0 0.0
    %228 = vmatpush1.msra.mxu0 0.0
    %229 = vmatprep.subr.mxu0 0.0
    %230 = vmatpush1.msra.mxu0 0.0
    %231 = vmatprep.subr.mxu0 0.0
    %232 = vmatpush1.msra.mxu0 0.0
    %233 = vmatprep.subr.mxu0 0.0
    %234 = vmatpush1.msra.mxu0 0.0
    %235 = vmatprep.subr.mxu0 0.0
    %236 = vmatpush1.msra.mxu0 0.0
    %237 = vmatprep.subr.mxu0 0.0
    %238 = vmatpush1.msra.mxu0 0.0
    %239 = vmatprep.subr.mxu0 0.0
    %240 = vmatpush1.msra.mxu0 0.0
    %241 = vmatprep.subr.mxu0 0.0
    %242 = vmatpush1.msra.mxu0 0.0
    %243 = vmatprep.subr.mxu0 0.0
    %244 = vmatpush1.msra.mxu0 0.0
    %245 = vmatprep.subr.mxu0 0.0
    %246 = vmatpush1.msra.mxu0 0.0
    %247 = vmatprep.subr.mxu0 0.0
    %248 = vmatpush1.msra.mxu0 0.0
    %249 = vmatprep.subr.mxu0 0.0
    %250 = vmatpush1.msra.mxu0 0.0
    %251 = vmatprep.mubr.f32.mxu0 0.0
    %252 = vmatmul.mubr.f32.gmra.mrb[0].mxu0 %v93
    %v253 = vpop.f32.mrb[0].mxu0
    %v254 = vadd.f32 %v186, %v253
    %v255 = vpop.f32.mrb[0].mxu0
    %256 = vmatprep.mubr.f32.mxu0 0.0
    %257 = vmatmul.mubr.f32.gmra.mrb[0].mxu0 %v96
    %v258 = vpop.f32.mrb[0].mxu0
    %v259 = vadd.f32 %v186, %v258
    %v260 = vpop.f32.mrb[0].mxu0
    %261 = vdwg.mxu0
    %v262 = vlaneseq
    %v263 = vshrl.u32 %v262, 7
    %v264 = vrot.slane %v173, 7
    %v265 = vrot.slane %v174, 7
    %vm266 = vcmp.lt.s32.totalorder %v263, 1
    %v267 = vsel %vm266, %v264, %v265
    %v268 = vsel %vm266, %v265, %v264
    %v269 = vadd.s32 %v263, 4294967295
    %vm270 = vcmp.ge.s32.totalorder %v269, 0
    %vm271 = vcmp.lt.s32.totalorder %v269, 8
    %vm272 = vmand %vm270, %vm271
    %v273 = vsel %vm272, %v268, 0.0
    %v274 = vsel %vm272, %v267, 0.0
    %v275 = vld [vmem:[#allocation7] sm:$0xff]
    %v276 = vld [vmem:[#allocation7 + $0x8] sm:$0xff]
    %v277 = vld [vmem:[#allocation7 + $0x10] sm:$0xff]
    %v278 = vld [vmem:[#allocation7 + $0x18] sm:$0xff]
    %v279 = vld [vmem:[#allocation7 + $0x20] sm:$0xff]
    %v280 = vld [vmem:[#allocation7 + $0x28] sm:$0xff]
    %v281 = vld [vmem:[#allocation7 + $0x30] sm:$0xff]
    %v282 = vld [vmem:[#allocation7 + $0x38] sm:$0xff]
    %v283 = vld [vmem:[#allocation7 + $0x40] sm:$0xff]
    %v284 = vld [vmem:[#allocation7 + $0x48] sm:$0xff]
    %v285 = vld [vmem:[#allocation7 + $0x50] sm:$0xff]
    %v286 = vld [vmem:[#allocation7 + $0x58] sm:$0xff]
    %v287 = vld [vmem:[#allocation7 + $0x60] sm:$0xff]
    %v288 = vld [vmem:[#allocation7 + $0x68] sm:$0xff]
    %v289 = vld [vmem:[#allocation7 + $0x70] sm:$0xff]
    %v290 = vld [vmem:[#allocation7 + $0x78] sm:$0xff]
    %291 = vmatprep.subr.mxu0 0.0
    %292 = vmatpush1.msra.mxu0 %v275
    %293 = vmatprep.subr.mxu0 0.0
    %294 = vmatpush1.msra.mxu0 %v276
    %295 = vmatprep.subr.mxu0 0.0
    %296 = vmatpush1.msra.mxu0 %v277
    %297 = vmatprep.subr.mxu0 0.0
    %298 = vmatpush1.msra.mxu0 %v278
    %299 = vmatprep.subr.mxu0 0.0
    %300 = vmatpush1.msra.mxu0 %v279
    %301 = vmatprep.subr.mxu0 0.0
    %302 = vmatpush1.msra.mxu0 %v280
    %303 = vmatprep.subr.mxu0 0.0
    %304 = vmatpush1.msra.mxu0 %v281
    %305 = vmatprep.subr.mxu0 0.0
    %306 = vmatpush1.msra.mxu0 %v282
    %307 = vmatprep.subr.mxu0 0.0
    %308 = vmatpush1.msra.mxu0 %v283
    %309 = vmatprep.subr.mxu0 0.0
    %310 = vmatpush1.msra.mxu0 %v284
    %311 = vmatprep.subr.mxu0 0.0
    %312 = vmatpush1.msra.mxu0 %v285
    %313 = vmatprep.subr.mxu0 0.0
    %314 = vmatpush1.msra.mxu0 %v286
    %315 = vmatprep.subr.mxu0 0.0
    %316 = vmatpush1.msra.mxu0 %v287
    %317 = vmatprep.subr.mxu0 0.0
    %318 = vmatpush1.msra.mxu0 %v288
    %319 = vmatprep.subr.mxu0 0.0
    %320 = vmatpush1.msra.mxu0 %v289
    %321 = vmatprep.subr.mxu0 0.0
    %322 = vmatpush1.msra.mxu0 %v290
    %323 = vmatprep.subr.mxu0 0.0
    %324 = vmatpush1.msra.mxu0 0.0
    %325 = vmatprep.subr.mxu0 0.0
    %326 = vmatpush1.msra.mxu0 0.0
    %327 = vmatprep.subr.mxu0 0.0
    %328 = vmatpush1.msra.mxu0 0.0
    %329 = vmatprep.subr.mxu0 0.0
    %330 = vmatpush1.msra.mxu0 0.0
    %331 = vmatprep.subr.mxu0 0.0
    %332 = vmatpush1.msra.mxu0 0.0
    %333 = vmatprep.subr.mxu0 0.0
    %334 = vmatpush1.msra.mxu0 0.0
    %335 = vmatprep.subr.mxu0 0.0
    %336 = vmatpush1.msra.mxu0 0.0
    %337 = vmatprep.subr.mxu0 0.0
    %338 = vmatpush1.msra.mxu0 0.0
    %339 = vmatprep.subr.mxu0 0.0
    %340 = vmatpush1.msra.mxu0 0.0
    %341 = vmatprep.subr.mxu0 0.0
    %342 = vmatpush1.msra.mxu0 0.0
    %343 = vmatprep.subr.mxu0 0.0
    %344 = vmatpush1.msra.mxu0 0.0
    %345 = vmatprep.subr.mxu0 0.0
    %346 = vmatpush1.msra.mxu0 0.0
    %347 = vmatprep.subr.mxu0 0.0
    %348 = vmatpush1.msra.mxu0 0.0
    %349 = vmatprep.subr.mxu0 0.0
    %350 = vmatpush1.msra.mxu0 0.0
    %351 = vmatprep.subr.mxu0 0.0
    %352 = vmatpush1.msra.mxu0 0.0
    %353 = vmatprep.subr.mxu0 0.0
    %354 = vmatpush1.msra.mxu0 0.0
    %355 = vmatprep.mubr.f32.mxu0 0.0
    %356 = vmatmul.mubr.f32.gmra.mrb[0].mxu0 %v273
    %v357 = vpop.f32.mrb[0].mxu0
    %v358 = vadd.f32 0.0, %v357
    %v359 = vpop.f32.mrb[0].mxu0
    %360 = vmatprep.mubr.f32.mxu0 0.0
    %361 = vmatmul.mubr.f32.gmra.mrb[0].mxu0 %v274
    %v362 = vpop.f32.mrb[0].mxu0
    %v363 = vadd.f32 0.0, %v362
    %v364 = vpop.f32.mrb[0].mxu0
    %365 = vdwg.mxu0
    %v366 = vadd.f32 %v254, %v358
    %v367 = vadd.f32 %v259, %v363
    %s368 = scalar_lea.vmem [#allocation7], 128
    %v369 = vld [vmem:[%s368] sm:$0xff]
    %v370 = vld [vmem:[%s368 + $0x8] sm:$0xff]
    %v371 = vld [vmem:[%s368 + $0x10] sm:$0xff]
    %v372 = vld [vmem:[%s368 + $0x18] sm:$0xff]
    %v373 = vld [vmem:[%s368 + $0x20] sm:$0xff]
    %v374 = vld [vmem:[%s368 + $0x28] sm:$0xff]
    %v375 = vld [vmem:[%s368 + $0x30] sm:$0xff]
    %v376 = vld [vmem:[%s368 + $0x38] sm:$0xff]
    %v377 = vld [vmem:[%s368 + $0x40] sm:$0xff]
    %v378 = vld [vmem:[%s368 + $0x48] sm:$0xff]
    %v379 = vld [vmem:[%s368 + $0x50] sm:$0xff]
    %v380 = vld [vmem:[%s368 + $0x58] sm:$0xff]
    %v381 = vld [vmem:[%s368 + $0x60] sm:$0xff]
    %v382 = vld [vmem:[%s368 + $0x68] sm:$0xff]
    %v383 = vld [vmem:[%s368 + $0x70] sm:$0xff]
    %v384 = vld [vmem:[%s368 + $0x78] sm:$0xff]
    %385 = vmatprep.subr.mxu0 0.0
    %386 = vmatpush1.msra.mxu0 %v369
    %387 = vmatprep.subr.mxu0 0.0
    %388 = vmatpush1.msra.mxu0 %v370
    %389 = vmatprep.subr.mxu0 0.0
    %390 = vmatpush1.msra.mxu0 %v371
    %391 = vmatprep.subr.mxu0 0.0
    %392 = vmatpush1.msra.mxu0 %v372
    %393 = vmatprep.subr.mxu0 0.0
    %394 = vmatpush1.msra.mxu0 %v373
    %395 = vmatprep.subr.mxu0 0.0
    %396 = vmatpush1.msra.mxu0 %v374
    %397 = vmatprep.subr.mxu0 0.0
    %398 = vmatpush1.msra.mxu0 %v375
    %399 = vmatprep.subr.mxu0 0.0
    %400 = vmatpush1.msra.mxu0 %v376
    %401 = vmatprep.subr.mxu0 0.0
    %402 = vmatpush1.msra.mxu0 %v377
    %403 = vmatprep.subr.mxu0 0.0
    %404 = vmatpush1.msra.mxu0 %v378
    %405 = vmatprep.subr.mxu0 0.0
    %406 = vmatpush1.msra.mxu0 %v379
    %407 = vmatprep.subr.mxu0 0.0
    %408 = vmatpush1.msra.mxu0 %v380
    %409 = vmatprep.subr.mxu0 0.0
    %410 = vmatpush1.msra.mxu0 %v381
    %411 = vmatprep.subr.mxu0 0.0
    %412 = vmatpush1.msra.mxu0 %v382
    %413 = vmatprep.subr.mxu0 0.0
    %414 = vmatpush1.msra.mxu0 %v383
    %415 = vmatprep.subr.mxu0 0.0
    %416 = vmatpush1.msra.mxu0 %v384
    %417 = vmatprep.subr.mxu0 0.0
    %418 = vmatpush1.msra.mxu0 0.0
    %419 = vmatprep.subr.mxu0 0.0
    %420 = vmatpush1.msra.mxu0 0.0
    %421 = vmatprep.subr.mxu0 0.0
    %422 = vmatpush1.msra.mxu0 0.0
    %423 = vmatprep.subr.mxu0 0.0
    %424 = vmatpush1.msra.mxu0 0.0
    %425 = vmatprep.subr.mxu0 0.0
    %426 = vmatpush1.msra.mxu0 0.0
    %427 = vmatprep.subr.mxu0 0.0
    %428 = vmatpush1.msra.mxu0 0.0
    %429 = vmatprep.subr.mxu0 0.0
    %430 = vmatpush1.msra.mxu0 0.0
    %431 = vmatprep.subr.mxu0 0.0
    %432 = vmatpush1.msra.mxu0 0.0
    %433 = vmatprep.subr.mxu0 0.0
    %434 = vmatpush1.msra.mxu0 0.0
    %435 = vmatprep.subr.mxu0 0.0
    %436 = vmatpush1.msra.mxu0 0.0
    %437 = vmatprep.subr.mxu0 0.0
    %438 = vmatpush1.msra.mxu0 0.0
    %439 = vmatprep.subr.mxu0 0.0
    %440 = vmatpush1.msra.mxu0 0.0
    %441 = vmatprep.subr.mxu0 0.0
    %442 = vmatpush1.msra.mxu0 0.0
    %443 = vmatprep.subr.mxu0 0.0
    %444 = vmatpush1.msra.mxu0 0.0
    %445 = vmatprep.subr.mxu0 0.0
    %446 = vmatpush1.msra.mxu0 0.0
    %447 = vmatprep.subr.mxu0 0.0
    %448 = vmatpush1.msra.mxu0 0.0
    %449 = vmatprep.mubr.f32.mxu0 0.0
    %450 = vmatmul.mubr.f32.gmra.mrb[0].mxu0 %v173
    %v451 = vpop.f32.mrb[0].mxu0
    %v452 = vadd.f32 0.0, %v451
    %v453 = vpop.f32.mrb[0].mxu0
    %454 = vmatprep.mubr.f32.mxu0 0.0
    %455 = vmatmul.mubr.f32.gmra.mrb[0].mxu0 %v174
    %v456 = vpop.f32.mrb[0].mxu0
    %v457 = vadd.f32 0.0, %v456
    %v458 = vpop.f32.mrb[0].mxu0
    %459 = vdwg.mxu0
    %v460 = vadd.f32 %v366, %v452
    %v461 = vadd.f32 %v367, %v457
    %v462 = vrot.slane %v173, 1
    %v463 = vrot.slane %v174, 1
    %vm464 = vcmp.lt.s32.totalorder %v263, 7
    %v465 = vsel %vm464, %v462, %v463
    %v466 = vsel %vm464, %v463, %v462
    %v467 = vadd.s32 %v263, 1
    %vm468 = vcmp.ge.s32.totalorder %v467, 0
    %vm469 = vcmp.lt.s32.totalorder %v467, 8
    %vm470 = vmand %vm468, %vm469
    %v471 = vsel %vm470, %v465, 0.0
    %v472 = vsel %vm470, %v466, 0.0
    %s473 = scalar_lea.vmem [#allocation7], 256
    %v474 = vld [vmem:[%s473] sm:$0xff]
    %v475 = vld [vmem:[%s473 + $0x8] sm:$0xff]
    %v476 = vld [vmem:[%s473 + $0x10] sm:$0xff]
    %v477 = vld [vmem:[%s473 + $0x18] sm:$0xff]
    %v478 = vld [vmem:[%s473 + $0x20] sm:$0xff]
    %v479 = vld [vmem:[%s473 + $0x28] sm:$0xff]
    %v480 = vld [vmem:[%s473 + $0x30] sm:$0xff]
    %v481 = vld [vmem:[%s473 + $0x38] sm:$0xff]
    %v482 = vld [vmem:[%s473 + $0x40] sm:$0xff]
    %v483 = vld [vmem:[%s473 + $0x48] sm:$0xff]
    %v484 = vld [vmem:[%s473 + $0x50] sm:$0xff]
    %v485 = vld [vmem:[%s473 + $0x58] sm:$0xff]
    %v486 = vld [vmem:[%s473 + $0x60] sm:$0xff]
    %v487 = vld [vmem:[%s473 + $0x68] sm:$0xff]
    %v488 = vld [vmem:[%s473 + $0x70] sm:$0xff]
    %v489 = vld [vmem:[%s473 + $0x78] sm:$0xff]
    %490 = vmatprep.subr.mxu0 0.0
    %491 = vmatpush1.msra.mxu0 %v474
    %492 = vmatprep.subr.mxu0 0.0
    %493 = vmatpush1.msra.mxu0 %v475
    %494 = vmatprep.subr.mxu0 0.0
    %495 = vmatpush1.msra.mxu0 %v476
    %496 = vmatprep.subr.mxu0 0.0
    %497 = vmatpush1.msra.mxu0 %v477
    %498 = vmatprep.subr.mxu0 0.0
    %499 = vmatpush1.msra.mxu0 %v478
    %500 = vmatprep.subr.mxu0 0.0
    %501 = vmatpush1.msra.mxu0 %v479
    %502 = vmatprep.subr.mxu0 0.0
    %503 = vmatpush1.msra.mxu0 %v480
    %504 = vmatprep.subr.mxu0 0.0
    %505 = vmatpush1.msra.mxu0 %v481
    %506 = vmatprep.subr.mxu0 0.0
    %507 = vmatpush1.msra.mxu0 %v482
    %508 = vmatprep.subr.mxu0 0.0
    %509 = vmatpush1.msra.mxu0 %v483
    %510 = vmatprep.subr.mxu0 0.0
    %511 = vmatpush1.msra.mxu0 %v484
    %512 = vmatprep.subr.mxu0 0.0
    %513 = vmatpush1.msra.mxu0 %v485
    %514 = vmatprep.subr.mxu0 0.0
    %515 = vmatpush1.msra.mxu0 %v486
    %516 = vmatprep.subr.mxu0 0.0
    %517 = vmatpush1.msra.mxu0 %v487
    %518 = vmatprep.subr.mxu0 0.0
    %519 = vmatpush1.msra.mxu0 %v488
    %520 = vmatprep.subr.mxu0 0.0
    %521 = vmatpush1.msra.mxu0 %v489
    %522 = vmatprep.subr.mxu0 0.0
    %523 = vmatpush1.msra.mxu0 0.0
    %524 = vmatprep.subr.mxu0 0.0
    %525 = vmatpush1.msra.mxu0 0.0
    %526 = vmatprep.subr.mxu0 0.0
    %527 = vmatpush1.msra.mxu0 0.0
    %528 = vmatprep.subr.mxu0 0.0
    %529 = vmatpush1.msra.mxu0 0.0
    %530 = vmatprep.subr.mxu0 0.0
    %531 = vmatpush1.msra.mxu0 0.0
    %532 = vmatprep.subr.mxu0 0.0
    %533 = vmatpush1.msra.mxu0 0.0
    %534 = vmatprep.subr.mxu0 0.0
    %535 = vmatpush1.msra.mxu0 0.0
    %536 = vmatprep.subr.mxu0 0.0
    %537 = vmatpush1.msra.mxu0 0.0
    %538 = vmatprep.subr.mxu0 0.0
    %539 = vmatpush1.msra.mxu0 0.0
    %540 = vmatprep.subr.mxu0 0.0
    %541 = vmatpush1.msra.mxu0 0.0
    %542 = vmatprep.subr.mxu0 0.0
    %543 = vmatpush1.msra.mxu0 0.0
    %544 = vmatprep.subr.mxu0 0.0
    %545 = vmatpush1.msra.mxu0 0.0
    %546 = vmatprep.subr.mxu0 0.0
    %547 = vmatpush1.msra.mxu0 0.0
    %548 = vmatprep.subr.mxu0 0.0
    %549 = vmatpush1.msra.mxu0 0.0
    %550 = vmatprep.subr.mxu0 0.0
    %551 = vmatpush1.msra.mxu0 0.0
    %552 = vmatprep.subr.mxu0 0.0
    %553 = vmatpush1.msra.mxu0 0.0
    %554 = vmatprep.mubr.f32.mxu0 0.0
    %555 = vmatmul.mubr.f32.gmra.mrb[0].mxu0 %v471
    %v556 = vpop.f32.mrb[0].mxu0
    %v557 = vadd.f32 0.0, %v556
    %v558 = vpop.f32.mrb[0].mxu0
    %559 = vmatprep.mubr.f32.mxu0 0.0
    %560 = vmatmul.mubr.f32.gmra.mrb[0].mxu0 %v472
    %v561 = vpop.f32.mrb[0].mxu0
    %v562 = vadd.f32 0.0, %v561
    %v563 = vpop.f32.mrb[0].mxu0
    %564 = vdwg.mxu0
    %v565 = vadd.f32 %v460, %v557
    %v566 = vadd.f32 %v461, %v562
    %v567 = vmax.f32 %v565, 0.0
    %v568 = vmax.f32 %v566, 0.0
    %569 = vst [vmem:[#allocation10] sm:$0xff] %v567
    %570 = vst [vmem:[#allocation10 + $0x8] sm:$0xff] %v568
    // Predicated region
    $region38: #{tpu_custom_call.1} parent=1 // pred_check
      _
    $region39: #{tpu_custom_call.1} parent=1 // pred_check_branch
      %572 = sbr.rel (0) target = $region41
    $region40: #{tpu_custom_call.1} parent=1 // pred_region
      %s574 = ssub.s32 256, 256
      %575 = vsyncadd [#allocation4], %s574
      %s576 = sshll.u32 [#allocation10], 4
      %s577 = int_to_ptr.vmem [resolvable:$true] %s576
      %582 = dma.vmem_to_hbm [thread:$0]  %s577, 256, %s5, [#allocation4], 128, 128, 8
    $region41: #{tpu_custom_call.1} parent=1 // pred_fallthru
      _
    // Predicated region
    $region42: #{tpu_custom_call.1} parent=1 // pred_check
      _
    $region43: #{tpu_custom_call.1} parent=1 // pred_check_branch
      %584 = sbr.rel (0) target = $region45
    $region44: #{tpu_custom_call.1} parent=1 // pred_region
      %585 = dma.done [#allocation4], 256
    $region45: #{tpu_custom_call.1} parent=1 // pred_fallthru
      _
    %586 = vsyncpa [#allocation3], 1
    %587 = vsyncpa [#allocation6], 1
    %588 = vsyncpa [#allocation9], 1
    %589 = vsyncpa [#allocation4], 1

</llo_original>
